<compile_context>
chip_gen: v6e
topology: v6e:2x2x1
jax: 0.10.0
libtpu: 0.0.40
codegen_flags: <defaults>
</compile_context>

<pallas_src>
import functools
import math

import jax
import jax.numpy as jnp
from jax.experimental import pallas as pl
from jax.experimental.pallas import tpu as pltpu


# Conservative working-set budget: safe for v7x (64 MiB physical / TC) while still far
# below v5e/v6e's 128 MiB.  vmem_limit_bytes is derived from the actual need + margin.
_VMEM_WORKING_SET_BUDGET = 40 * 1024 * 1024


def _round_up(x, m):
    return ((x + m - 1) // m) * m


def _maybe_pad(arr, shape, dtype=None):
    """Zero-pad `arr` up to `shape` (and optionally cast); no-op when already matching."""
    dt = arr.dtype if dtype is None else jnp.dtype(dtype)
    if arr.dtype != dt:
        arr = arr.astype(dt)
    pads = tuple((0, t - s) for s, t in zip(arr.shape, shape))
    if any(p for _, p in pads):
        arr = jnp.pad(arr, pads)
    return arr


def _pick_row_tiling(n, max_row_tile, max_reduce_tile):
    """Pick padded N and (row tile, reduction tile), all multiples of 128."""
    n_p = _round_up(n, 128)
    tm = min(max_row_tile, 512 if n_p >= 1024 else (256 if n_p >= 256 else 128), n_p)
    n_p = _round_up(n_p, tm)  # pad so we never fall back to tiny tiles
    tk = tm
    while tk * 2 <= min(max_reduce_tile, n_p) and n_p % (tk * 2) == 0:
        tk *= 2
    return n_p, tm, tk


def _pass2_vmem_bytes(tm, tk, n_p, f_out_p, adj_isz, s_isz, out_isz, resident, has_bias):
    """Approximate pass-2 VMEM working set (double-buffered inputs/outputs + acc)."""
    acc = tm * f_out_p * 4
    out = 2 * tm * f_out_p * out_isz
    adj = 2 * tm * tk * adj_isz
    bias = (2 * 8 * f_out_p * 4) if has_bias else 0
    sup = (2 * n_p * f_out_p * s_isz) if resident else (2 * tk * f_out_p * s_isz)
    return acc + out + adj + bias + sup


# ---------------- Pass 1: support = X @ W (tiled rows x F_out x F_in-reduction) ------
def _support_kernel(x_ref, w_ref, s_ref, acc_ref):
    k = pl.program_id(2)

    @pl.when(k == 0)
    def _():
        acc_ref[...] = jnp.zeros_like(acc_ref)

    acc_ref[...] += jnp.dot(x_ref[...], w_ref[...], preferred_element_type=jnp.float32)

    @pl.when(k == pl.num_programs(2) - 1)
    def _():
        s_ref[...] = acc_ref[...].astype(s_ref.dtype)


# ---------------- Pass 2: out = adj @ support (+ bias) -------------------------------
def _make_aggregate_kernel(has_bias, resident, tk, adj_cast_dtype):
    """Build the pass-2 kernel. `resident` => support block is the full matrix in VMEM."""

    def kernel(*refs):
        if has_bias:
            adj_ref, s_ref, b_ref, o_ref, acc_ref = refs
        else:
            adj_ref, s_ref, o_ref, acc_ref = refs
            b_ref = None
        k = pl.program_id(1)

        @pl.when(k == 0)
        def _():
            acc_ref[...] = jnp.zeros_like(acc_ref)

        a_blk = adj_ref[...]
        if adj_cast_dtype is not None:
            # In-kernel cast (MXU rate) instead of an extra wrapper-side N^2 HBM pass.
            a_blk = a_blk.astype(adj_cast_dtype)

        if resident:
            start = pl.multiple_of(k * tk, tk)
            s_blk = s_ref[pl.ds(start, tk), :]
        else:
            s_blk = s_ref[...]

        acc_ref[...] += jnp.dot(a_blk, s_blk, preferred_element_type=jnp.float32)

        @pl.when(k == pl.num_programs(1) - 1)
        def _():
            r = acc_ref[...]
            if has_bias:
                r = r + b_ref[...]  # bias kept in f32 for the epilogue add
            o_ref[...] = r.astype(o_ref.dtype)

    return kernel


def graph_convolution(
    x,
    adj,
    weight,
    bias=None,
    *,
    compute_dtype=None,
    max_row_tile=512,
    max_reduce_tile=2048,
    vmem_budget_bytes=_VMEM_WORKING_SET_BUDGET,
):
    """GCN layer forward: adj @ (x @ weight) (+ bias).

    x: [N, F_in], adj: [N, N], weight: [F_in, F_out], bias: [F_out] or None.
    compute_dtype: e.g. jnp.bfloat16 to run the MXU in bf16 (accumulation stays f32,
    adj is cast in-kernel so its HBM bytes are unchanged).  Default keeps x.dtype.
    """
    n, f_in = x.shape
    f_out = weight.shape[1]
    out_dtype = x.dtype
    dt = jnp.dtype(compute_dtype) if compute_dtype is not None else jnp.dtype(x.dtype)

    # ---- Padded / tiled shapes (all minor dims lane-dense multiples of 128) --------
    n_p, tm, tk = _pick_row_tiling(n, max_row_tile, max_reduce_tile)

    f_in_p = _round_up(f_in, 128)
    tk1 = f_in_p if f_in_p <= 512 else 512
    f_in_p = _round_up(f_in_p, tk1)

    f_out_p = _round_up(f_out, 128)
    tn1 = f_out_p if f_out_p <= 512 else 512  # multiples of 256 once f_out is large
    f_out_p = _round_up(f_out_p, tn1)

    # ---- Wrapper-side padding (skipped entirely when already aligned) --------------
    # x / weight are small -> cast+pad here.  adj is the HBM-bound stream: keep its
    # stored dtype; only pad when N is not tile-aligned.
    x_p = _maybe_pad(x, (n_p, f_in_p), dt)
    w_p = _maybe_pad(weight, (f_in_p, f_out_p), dt)
    adj_p = _maybe_pad(adj, (n_p, n_p))
    adj_isz = adj_p.dtype.itemsize
    adj_cast = dt if adj_p.dtype != dt else None

    s_isz = dt.itemsize
    out_isz = jnp.dtype(out_dtype).itemsize
    has_bias = bias is not None

    # ---- Pass 1: support = X @ W ----------------------------------------------------
    p1_flops = 2 * n_p * f_in_p * f_out_p
    p1_bytes = (n_p * f_in_p + f_in_p * f_out_p + n_p * f_out_p) * s_isz
    support = pl.pallas_call(
        _support_kernel,
        out_shape=jax.ShapeDtypeStruct((n_p, f_out_p), dt),
        grid=(n_p // tm, f_out_p // tn1, f_in_p // tk1),
        in_specs=[
            pl.BlockSpec((tm, tk1), lambda i, j, k: (i, k)),
            pl.BlockSpec((tk1, tn1), lambda i, j, k: (k, j)),
        ],
        out_specs=pl.BlockSpec((tm, tn1), lambda i, j, k: (i, j)),
        scratch_shapes=[pltpu.VMEM((tm, tn1), jnp.float32)],
        compiler_params=pltpu.CompilerParams(
            dimension_semantics=("parallel", "parallel", "arbitrary"),
            vmem_limit_bytes=32 * 1024 * 1024,
        ),
        cost_estimate=pl.CostEstimate(
            flops=p1_flops, transcendentals=0, bytes_accessed=p1_bytes
        ),
    )(x_p, w_p)

    # ---- Pass 2: out = adj @ support (+ bias) ---------------------------------------
    # Prefer VMEM-resident support (single HBM read); fall back to streaming and then
    # to smaller tiles if the working set exceeds the per-generation budget.
    resident = (
        _pass2_vmem_bytes(tm, tk, n_p, f_out_p, adj_isz, s_isz, out_isz, True, has_bias)
        <= vmem_budget_bytes
    )
    tm2, tk2 = tm, tk
    if not resident:
        while (
            _pass2_vmem_bytes(tm2, tk2, n_p, f_out_p, adj_isz, s_isz, out_isz, False, has_bias)
            > vmem_budget_bytes
            and tk2 > tm2
        ):
            tk2 //= 2
        while (
            _pass2_vmem_bytes(tm2, tk2, n_p, f_out_p, adj_isz, s_isz, out_isz, False, has_bias)
            > vmem_budget_bytes
            and tm2 > 128
        ):
            tm2 //= 2
            tk2 = max(tk2 // 2, tm2)
    # TODO(synk): tile f_out inside pass 2 for extremely large out_features where even
    # the minimum (128, 128) tiles exceed the VMEM budget.
    need = _pass2_vmem_bytes(
        tm2, tk2, n_p, f_out_p, adj_isz, s_isz, out_isz, resident, has_bias
    )
    vmem_limit = max(32 * 1024 * 1024, need + 8 * 1024 * 1024)

    adj_spec = pl.BlockSpec((tm2, tk2), lambda i, k: (i, k))
    if resident:
        sup_spec = pl.BlockSpec((n_p, f_out_p), lambda i, k: (0, 0))
    else:
        sup_spec = pl.BlockSpec((tk2, f_out_p), lambda i, k: (k, 0))

    kernel = _make_aggregate_kernel(has_bias, resident, tk2, adj_cast)

    p2_flops = 2 * n_p * n_p * f_out_p
    p2_bytes = n_p * n_p * adj_isz + n_p * f_out_p * s_isz + n_p * f_out_p * out_isz
    common = dict(
        out_shape=jax.ShapeDtypeStruct((n_p, f_out_p), out_dtype),
        grid=(n_p // tm2, n_p // tk2),
        out_specs=pl.BlockSpec((tm2, f_out_p), lambda i, k: (i, 0)),
        scratch_shapes=[pltpu.VMEM((tm2, f_out_p), jnp.float32)],
        compiler_params=pltpu.CompilerParams(
            dimension_semantics=("parallel", "arbitrary"),
            vmem_limit_bytes=vmem_limit,
        ),
        cost_estimate=pl.CostEstimate(
            flops=p2_flops, transcendentals=0, bytes_accessed=p2_bytes
        ),
    )

    if has_bias:
        b_p = _maybe_pad(bias.reshape(1, -1), (1, f_out_p), jnp.float32)  # stays f32
        out_p = pl.pallas_call(
            kernel,
            in_specs=[adj_spec, sup_spec, pl.BlockSpec((1, f_out_p), lambda i, k: (0, 0))],
            **common,
        )(adj_p, support, b_p)
    else:
        out_p = pl.pallas_call(kernel, in_specs=[adj_spec, sup_spec], **common)(adj_p, support)

    if n_p == n and f_out_p == f_out:
        return out_p
    return out_p[:n, :f_out]


if __name__ == "__main__":
    # Module config (synthetic, deterministic init mirroring reset_parameters)
    in_features, out_features, n_nodes = 32, 64, 16

    key = jax.random.PRNGKey(0)
    k_x, k_adj, k_w, k_b = jax.random.split(key, 4)

    stdv = 1.0 / math.sqrt(out_features)
    weight = jax.random.uniform(
        k_w, (in_features, out_features), jnp.float32, minval=-stdv, maxval=stdv
    )
    bias = jax.random.uniform(
        k_b, (out_features,), jnp.float32, minval=-stdv, maxval=stdv
    )
    x = jax.random.normal(k_x, (n_nodes, in_features), jnp.float32)
    a = jax.random.uniform(k_adj, (n_nodes, n_nodes), jnp.float32)
    adj = (a + a.T) * 0.5  # symmetric dense adjacency

    # bias=True path
    out = jax.block_until_ready(graph_convolution(x, adj, weight, bias))
    ref = adj @ (x @ weight) + bias
    assert out.shape == (n_nodes, out_features)
    assert jnp.allclose(out, ref, atol=1e-4, rtol=1e-4), "mismatch vs reference (bias)"

    # bias=False path (compile-time branch: no zero-bias DMA / add)
    out_nb = jax.block_until_ready(graph_convolution(x, adj, weight, None))
    ref_nb = adj @ (x @ weight)
    assert jnp.allclose(out_nb, ref_nb, atol=1e-4, rtol=1e-4), "mismatch (no bias)"

    # Slightly larger (still small) case: exercises padding, multi-row-tile grid and
    # the VMEM-resident support path.
    n2, fi2, fo2 = 300, 48, 96
    k_x2, k_adj2, k_w2, k_b2 = jax.random.split(jax.random.PRNGKey(1), 4)
    w2 = jax.random.uniform(k_w2, (fi2, fo2), jnp.float32, minval=-0.1, maxval=0.1)
    b2 = jax.random.uniform(k_b2, (fo2,), jnp.float32, minval=-0.1, maxval=0.1)
    x2 = jax.random.normal(k_x2, (n2, fi2), jnp.float32)
    a2 = jax.random.uniform(k_adj2, (n2, n2), jnp.float32)
    adj2 = (a2 + a2.T) * 0.5
    hi = jax.lax.Precision.HIGHEST
    ref2 = jnp.dot(adj2, jnp.dot(x2, w2, precision=hi), precision=hi) + b2

    out2 = jax.block_until_ready(graph_convolution(x2, adj2, w2, b2))
    assert jnp.allclose(out2, ref2, atol=2e-2, rtol=2e-2), "mismatch (resident path)"

    # Force small tiles -> multi-step reduction with in-kernel slab slicing (resident),
    # and a tiny budget -> streamed-support fallback.  Both must match the reference.
    out3 = jax.block_until_ready(
        graph_convolution(x2, adj2, w2, b2, max_row_tile=128, max_reduce_tile=128)
    )
    assert jnp.allclose(out3, ref2, atol=2e-2, rtol=2e-2), "mismatch (multi-k resident)"
    out4 = jax.block_until_ready(
        graph_convolution(x2, adj2, w2, b2, vmem_budget_bytes=1 << 20)
    )
    assert jnp.allclose(out4, ref2, atol=2e-2, rtol=2e-2), "mismatch (streamed fallback)"

    print("KERNEL_OK")
</pallas_src>

<mosaic_0001>
module attributes {stable_mosaic.version = 11 : i64} {
  func.func @_support_kernel(%arg0: i32, %arg1: i32, %arg2: i32, %arg3: memref<128x128xf32, #tpu.memory_space<vmem>>, %arg4: memref<128x128xf32, #tpu.memory_space<vmem>>, %arg5: memref<128x128xf32, #tpu.memory_space<vmem>>, %arg6: memref<128x128xf32, #tpu.memory_space<vmem>>) attributes {dimension_semantics = [#tpu.dimension_semantics<parallel>, #tpu.dimension_semantics<parallel>, #tpu.dimension_semantics<arbitrary>], iteration_bounds = array<i64: 1, 1, 1>, scalar_prefetch = 0 : i64, scratch_operands = 1 : i64, tpu.core_type = #tpu.core_type<tc>, window_params = [{transform_indices = @transform_0, window_bounds = array<i64: 128, 128>}, {transform_indices = @transform_1, window_bounds = array<i64: 128, 128>}, {transform_indices = @transform_2, window_bounds = array<i64: 128, 128>}]} {
    %c0_i32 = arith.constant 0 : i32
    %0 = arith.cmpi eq, %arg2, %c0_i32 : i32
    %1 = arith.extui %0 : i1 to i32
    %c0_i32_0 = arith.constant 0 : i32
    %2 = arith.cmpi ne, %1, %c0_i32_0 : i32
    scf.if %2 {
      %cst_10 = arith.constant 0.000000e+00 : f32
      %12 = vector.broadcast %cst_10 : f32 to vector<128x128xf32>
      %c0_11 = arith.constant 0 : index
      %c0_12 = arith.constant 0 : index
      %13 = vector.load %arg6[%c0_11, %c0_12] : memref<128x128xf32, #tpu.memory_space<vmem>>, vector<128x128xf32>
      tpu.vector_store %arg6[%c0_11, %c0_12], %12 {strides = array<i32>} : memref<128x128xf32, #tpu.memory_space<vmem>>, vector<128x128xf32>,
    } else {
    }
    %c0 = arith.constant 0 : index
    %c0_1 = arith.constant 0 : index
    %3 = vector.load %arg6[%c0, %c0_1] : memref<128x128xf32, #tpu.memory_space<vmem>>, vector<128x128xf32>
    %c0_2 = arith.constant 0 : index
    %c0_3 = arith.constant 0 : index
    %4 = vector.load %arg3[%c0_2, %c0_3] : memref<128x128xf32, #tpu.memory_space<vmem>>, vector<128x128xf32>
    %c0_4 = arith.constant 0 : index
    %c0_5 = arith.constant 0 : index
    %5 = vector.load %arg4[%c0_4, %c0_5] : memref<128x128xf32, #tpu.memory_space<vmem>>, vector<128x128xf32>
    %cst = arith.constant dense<0.000000e+00> : vector<128x128xf32>
    %6 = tpu.matmul %4, %5, %cst {dimension_numbers = #tpu.dot_dimension_numbers<[1], [0], [0], [1], [0, 0, 1, 1], [], []>} : vector<128x128xf32>, vector<128x128xf32>, vector<128x128xf32> -> vector<128x128xf32>
    %7 = arith.addf %3, %6 : vector<128x128xf32>
    %c0_6 = arith.constant 0 : index
    %c0_7 = arith.constant 0 : index
    %8 = vector.load %arg6[%c0_6, %c0_7] : memref<128x128xf32, #tpu.memory_space<vmem>>, vector<128x128xf32>
    tpu.vector_store %arg6[%c0_6, %c0_7], %7 {strides = array<i32>} : memref<128x128xf32, #tpu.memory_space<vmem>>, vector<128x128xf32>,
    %c0_i32_8 = arith.constant 0 : i32
    %9 = arith.cmpi eq, %arg2, %c0_i32_8 : i32
    %10 = arith.extui %9 : i1 to i32
    %c0_i32_9 = arith.constant 0 : i32
    %11 = arith.cmpi ne, %10, %c0_i32_9 : i32
    scf.if %11 {
      %c0_10 = arith.constant 0 : index
      %c0_11 = arith.constant 0 : index
      %12 = vector.load %arg6[%c0_10, %c0_11] : memref<128x128xf32, #tpu.memory_space<vmem>>, vector<128x128xf32>
      %c0_12 = arith.constant 0 : index
      %c0_13 = arith.constant 0 : index
      %13 = vector.load %arg5[%c0_12, %c0_13] : memref<128x128xf32, #tpu.memory_space<vmem>>, vector<128x128xf32>
      tpu.vector_store %arg5[%c0_12, %c0_13], %12 {strides = array<i32>} : memref<128x128xf32, #tpu.memory_space<vmem>>, vector<128x128xf32>,
    } else {
    }
    return
  }
  func.func @transform_0(%arg0: i32, %arg1: i32, %arg2: i32) -> (i32, i32) {
    %c0_i32 = arith.constant 0 : i32
    return %arg0, %arg2 : i32, i32
  }
  func.func @transform_1(%arg0: i32, %arg1: i32, %arg2: i32) -> (i32, i32) {
    %c0_i32 = arith.constant 0 : i32
    return %arg2, %arg1 : i32, i32
  }
  func.func @transform_2(%arg0: i32, %arg1: i32, %arg2: i32) -> (i32, i32) {
    %c0_i32 = arith.constant 0 : i32
    return %arg0, %arg1 : i32, i32
  }
}

</mosaic_0001>

<llo_original>
// kernel: tpu_custom_call.1
$region0: #{tpu_custom_call.1}
  #allocation0 [shape = 'u32[]', space=smem, size = 0x4, offset = 0x4, fixed_abs, tag = 'smem constant byte address 0x4 - core index']
  #allocation1 [shape = 'u32[144,128]{1,0:T(1,128)}', space=vmem, size = 0x12000, scoped, tag = 'internal scratch']
  #allocation2 [shape = 'f32[128,128]{1,0:T(8,128)}', space=vmem, size = 0x10000, scoped, tag = 'scratch operand']
  %s0 = inlined_call_operand.hbm [shape: f32[128,128], index: 0, kind: input, shape index: {}]
  %s1 = inlined_call_operand.hbm [shape: f32[128,128], index: 1, kind: input, shape index: {}]
  %s2 = inlined_call_operand.hbm [shape: f32[128,128], index: 2, kind: output, shape index: {}]
  %s3 = sld [smem:[#allocation0]]
  $region34: #{tpu_custom_call.1} parent=0
    _
  %s5 = ssub.s32 1, %s3
  %s6 = scalar_select 0, %s5, %s3
  $region1: #{tpu_custom_call.1} parent=0
    #allocation3 [shape = 'u8[65536]{0}', space=vmem, size = 0x10000, scoped, tag = 'input window, operand 0, single buffered']
    #allocation4 [shape = 's32[1]{0}', space=sflag, size = 0x4, scoped, tag = 'scoped memory for tpu_custom_call.1']
    #allocation5 [shape = 's32[1]{0}', space=sflag, size = 0x4, scoped, tag = 'scoped memory for tpu_custom_call.1']
    #allocation6 [shape = 'u8[65536]{0}', space=vmem, size = 0x10000, scoped, tag = 'input window, operand 1, single buffered']
    #allocation7 [shape = 's32[1]{0}', space=sflag, size = 0x4, scoped, tag = 'scoped memory for tpu_custom_call.1']
    #allocation8 [shape = 'u8[65536]{0}', space=vmem, size = 0x10000, scoped, tag = 'output window, operand 0, single buffered']
    %7 = vsyncpa [#allocation4], 0
    %8 = vsyncpa [#allocation7], 0
    %9 = vsyncpa [#allocation5], 0
    // Predicated region
    $region2: #{tpu_custom_call.1} parent=1 // pred_check
      _
    $region3: #{tpu_custom_call.1} parent=1 // pred_check_branch
      %11 = sbr.rel (0) target = $region5
    $region4: #{tpu_custom_call.1} parent=1 // pred_region
      %s13 = ssub.s32 2048, 2048
      %14 = vsyncadd [#allocation4], %s13
      %s15 = sshll.u32 [#allocation3], 4
      %s16 = int_to_ptr.vmem [resolvable:$true] %s15
      %21 = dma.hbm_to_vmem [thread:$0]  %s0, 2048, %s16, [#allocation4], 128, 128, 8
    $region5: #{tpu_custom_call.1} parent=1 // pred_fallthru
      _
    // Predicated region
    $region6: #{tpu_custom_call.1} parent=1 // pred_check
      _
    $region7: #{tpu_custom_call.1} parent=1 // pred_check_branch
      %23 = sbr.rel (0) target = $region9
    $region8: #{tpu_custom_call.1} parent=1 // pred_region
      %s25 = ssub.s32 2048, 2048
      %26 = vsyncadd [#allocation7], %s25
      %s27 = sshll.u32 [#allocation6], 4
      %s28 = int_to_ptr.vmem [resolvable:$true] %s27
      %33 = dma.hbm_to_vmem [thread:$0]  %s1, 2048, %s28, [#allocation7], 128, 128, 8
    $region9: #{tpu_custom_call.1} parent=1 // pred_fallthru
      _
    // Predicated region
    $region10: #{tpu_custom_call.1} parent=1 // pred_check
      _
    $region11: #{tpu_custom_call.1} parent=1 // pred_check_branch
      %35 = sbr.rel (0) target = $region13
    $region12: #{tpu_custom_call.1} parent=1 // pred_region
      %36 = dma.done [#allocation4], 2048
    $region13: #{tpu_custom_call.1} parent=1 // pred_fallthru
      _
    // Predicated region
    $region14: #{tpu_custom_call.1} parent=1 // pred_check
      _
    $region15: #{tpu_custom_call.1} parent=1 // pred_check_branch
      %38 = sbr.rel (0) target = $region17
    $region16: #{tpu_custom_call.1} parent=1 // pred_region
      %39 = dma.done [#allocation7], 2048
    $region17: #{tpu_custom_call.1} parent=1 // pred_fallthru
      _
    %p40 = scmp.eq.s32.totalorder 0, 0
    // Predicated region
    $region18: #{tpu_custom_call.1} parent=1 // pred_check
      %p41 = pneg %p40
    $region19: #{tpu_custom_call.1} parent=1 // pred_check_branch
      %43 = sbr.rel (%p41) target = $region21
    $region20: #{tpu_custom_call.1} parent=1 // pred_region
      %44 = vst [vmem:[#allocation2] sm:$0xff] 0.0
      %45 = vst [vmem:[#allocation2 + $0x8] sm:$0xff] 0.0
      %46 = vst [vmem:[#allocation2 + $0x10] sm:$0xff] 0.0
      %47 = vst [vmem:[#allocation2 + $0x18] sm:$0xff] 0.0
      %48 = vst [vmem:[#allocation2 + $0x20] sm:$0xff] 0.0
      %49 = vst [vmem:[#allocation2 + $0x28] sm:$0xff] 0.0
      %50 = vst [vmem:[#allocation2 + $0x30] sm:$0xff] 0.0
      %51 = vst [vmem:[#allocation2 + $0x38] sm:$0xff] 0.0
      %52 = vst [vmem:[#allocation2 + $0x40] sm:$0xff] 0.0
      %53 = vst [vmem:[#allocation2 + $0x48] sm:$0xff] 0.0
      %54 = vst [vmem:[#allocation2 + $0x50] sm:$0xff] 0.0
      %55 = vst [vmem:[#allocation2 + $0x58] sm:$0xff] 0.0
      %56 = vst [vmem:[#allocation2 + $0x60] sm:$0xff] 0.0
      %57 = vst [vmem:[#allocation2 + $0x68] sm:$0xff] 0.0
      %58 = vst [vmem:[#allocation2 + $0x70] sm:$0xff] 0.0
      %59 = vst [vmem:[#allocation2 + $0x78] sm:$0xff] 0.0
    $region21: #{tpu_custom_call.1} parent=1 // pred_fallthru
      _
    %v60 = vld [vmem:[#allocation2] sm:$0xff]
    %v61 = vld [vmem:[#allocation2 + $0x8] sm:$0xff]
    %v62 = vld [vmem:[#allocation2 + $0x10] sm:$0xff]
    %v63 = vld [vmem:[#allocation2 + $0x18] sm:$0xff]
    %v64 = vld [vmem:[#allocation2 + $0x20] sm:$0xff]
    %v65 = vld [vmem:[#allocation2 + $0x28] sm:$0xff]
    %v66 = vld [vmem:[#allocation2 + $0x30] sm:$0xff]
    %v67 = vld [vmem:[#allocation2 + $0x38] sm:$0xff]
    %v68 = vld [vmem:[#allocation2 + $0x40] sm:$0xff]
    %v69 = vld [vmem:[#allocation2 + $0x48] sm:$0xff]
    %v70 = vld [vmem:[#allocation2 + $0x50] sm:$0xff]
    %v71 = vld [vmem:[#allocation2 + $0x58] sm:$0xff]
    %v72 = vld [vmem:[#allocation2 + $0x60] sm:$0xff]
    %v73 = vld [vmem:[#allocation2 + $0x68] sm:$0xff]
    %v74 = vld [vmem:[#allocation2 + $0x70] sm:$0xff]
    %v75 = vld [vmem:[#allocation2 + $0x78] sm:$0xff]
    %v76 = vld [vmem:[#allocation3] sm:$0xff]
    %v77 = vld [vmem:[#allocation3 + $0x8] sm:$0xff]
    %v78 = vld [vmem:[#allocation3 + $0x10] sm:$0xff]
    %v79 = vld [vmem:[#allocation3 + $0x18] sm:$0xff]
    %v80 = vld [vmem:[#allocation3 + $0x20] sm:$0xff]
    %v81 = vld [vmem:[#allocation3 + $0x28] sm:$0xff]
    %v82 = vld [vmem:[#allocation3 + $0x30] sm:$0xff]
    %v83 = vld [vmem:[#allocation3 + $0x38] sm:$0xff]
    %v84 = vld [vmem:[#allocation3 + $0x40] sm:$0xff]
    %v85 = vld [vmem:[#allocation3 + $0x48] sm:$0xff]
    %v86 = vld [vmem:[#allocation3 + $0x50] sm:$0xff]
    %v87 = vld [vmem:[#allocation3 + $0x58] sm:$0xff]
    %v88 = vld [vmem:[#allocation3 + $0x60] sm:$0xff]
    %v89 = vld [vmem:[#allocation3 + $0x68] sm:$0xff]
    %v90 = vld [vmem:[#allocation3 + $0x70] sm:$0xff]
    %v91 = vld [vmem:[#allocation3 + $0x78] sm:$0xff]
    %v92 = vld [vmem:[#allocation6] sm:$0xff]
    %v93 = vld [vmem:[#allocation6 + $0x8] sm:$0xff]
    %v94 = vld [vmem:[#allocation6 + $0x10] sm:$0xff]
    %v95 = vld [vmem:[#allocation6 + $0x18] sm:$0xff]
    %v96 = vld [vmem:[#allocation6 + $0x20] sm:$0xff]
    %v97 = vld [vmem:[#allocation6 + $0x28] sm:$0xff]
    %v98 = vld [vmem:[#allocation6 + $0x30] sm:$0xff]
    %v99 = vld [vmem:[#allocation6 + $0x38] sm:$0xff]
    %v100 = vld [vmem:[#allocation6 + $0x40] sm:$0xff]
    %v101 = vld [vmem:[#allocation6 + $0x48] sm:$0xff]
    %v102 = vld [vmem:[#allocation6 + $0x50] sm:$0xff]
    %v103 = vld [vmem:[#allocation6 + $0x58] sm:$0xff]
    %v104 = vld [vmem:[#allocation6 + $0x60] sm:$0xff]
    %v105 = vld [vmem:[#allocation6 + $0x68] sm:$0xff]
    %v106 = vld [vmem:[#allocation6 + $0x70] sm:$0xff]
    %v107 = vld [vmem:[#allocation6 + $0x78] sm:$0xff]
    %108 = vmatprep.subr.mxu0 0.0
    %109 = vmatpush1.msra.mxu0 %v107
    %110 = vmatprep.subr.mxu0 0.0
    %111 = vmatpush1.msra.mxu0 %v106
    %112 = vmatprep.subr.mxu0 0.0
    %113 = vmatpush1.msra.mxu0 %v105
    %114 = vmatprep.subr.mxu0 0.0
    %115 = vmatpush1.msra.mxu0 %v104
    %116 = vmatprep.subr.mxu0 0.0
    %117 = vmatpush1.msra.mxu0 %v103
    %118 = vmatprep.subr.mxu0 0.0
    %119 = vmatpush1.msra.mxu0 %v102
    %120 = vmatprep.subr.mxu0 0.0
    %121 = vmatpush1.msra.mxu0 %v101
    %122 = vmatprep.subr.mxu0 0.0
    %123 = vmatpush1.msra.mxu0 %v100
    %124 = vmatprep.subr.mxu0 0.0
    %125 = vmatpush1.msra.mxu0 %v99
    %126 = vmatprep.subr.mxu0 0.0
    %127 = vmatpush1.msra.mxu0 %v98
    %128 = vmatprep.subr.mxu0 0.0
    %129 = vmatpush1.msra.mxu0 %v97
    %130 = vmatprep.subr.mxu0 0.0
    %131 = vmatpush1.msra.mxu0 %v96
    %132 = vmatprep.subr.mxu0 0.0
    %133 = vmatpush1.msra.mxu0 %v95
    %134 = vmatprep.subr.mxu0 0.0
    %135 = vmatpush1.msra.mxu0 %v94
    %136 = vmatprep.subr.mxu0 0.0
    %137 = vmatpush1.msra.mxu0 %v93
    %138 = vmatprep.subr.mxu0 0.0
    %139 = vmatpush1.msra.mxu0 %v92
    %140 = vmatprep.subr.mxu0 0.0
    %141 = vmatpush2.msra.mxu0 0.0
    %142 = vmatprep.subr.mxu0 0.0
    %143 = vmatpush2.msra.mxu0 0.0
    %144 = vmatprep.subr.mxu0 0.0
    %145 = vmatpush2.msra.mxu0 0.0
    %146 = vmatprep.subr.mxu0 0.0
    %147 = vmatpush2.msra.mxu0 0.0
    %148 = vmatprep.subr.mxu0 0.0
    %149 = vmatpush2.msra.mxu0 0.0
    %150 = vmatprep.subr.mxu0 0.0
    %151 = vmatpush2.msra.mxu0 0.0
    %152 = vmatprep.subr.mxu0 0.0
    %153 = vmatpush2.msra.mxu0 0.0
    %154 = vmatprep.subr.mxu0 0.0
    %155 = vmatpush2.msra.mxu0 0.0
    %156 = vmatprep.subr.mxu0 0.0
    %157 = vmatpush2.msra.mxu0 0.0
    %158 = vmatprep.subr.mxu0 0.0
    %159 = vmatpush2.msra.mxu0 0.0
    %160 = vmatprep.subr.mxu0 0.0
    %161 = vmatpush2.msra.mxu0 0.0
    %162 = vmatprep.subr.mxu0 0.0
    %163 = vmatpush2.msra.mxu0 0.0
    %164 = vmatprep.subr.mxu0 0.0
    %165 = vmatpush2.msra.mxu0 0.0
    %166 = vmatprep.subr.mxu0 0.0
    %167 = vmatpush2.msra.mxu0 0.0
    %168 = vmatprep.subr.mxu0 0.0
    %169 = vmatpush2.msra.mxu0 0.0
    %170 = vmatprep.subr.mxu0 0.0
    %171 = vmatpush2.msra.mxu0 0.0
    %172 = vmatprep.mubr.f32.mxu0 0.0
    %173 = vmatmul.mubr.f32.gmra.mxu0 %v76
    %v174 = vpop.f32.mrf.mxu0
    %v175 = vadd.f32 0.0, %v174
    %v176 = vpop.f32.mrf.mxu0
    %177 = vmatprep.mubr.f32.mxu0 0.0
    %178 = vmatmul.mubr.f32.gmra.mxu0 %v77
    %v179 = vpop.f32.mrf.mxu0
    %v180 = vadd.f32 0.0, %v179
    %v181 = vpop.f32.mrf.mxu0
    %182 = vmatprep.mubr.f32.mxu0 0.0
    %183 = vmatmul.mubr.f32.gmra.mxu0 %v78
    %v184 = vpop.f32.mrf.mxu0
    %v185 = vadd.f32 0.0, %v184
    %v186 = vpop.f32.mrf.mxu0
    %187 = vmatprep.mubr.f32.mxu0 0.0
    %188 = vmatmul.mubr.f32.gmra.mxu0 %v79
    %v189 = vpop.f32.mrf.mxu0
    %v190 = vadd.f32 0.0, %v189
    %v191 = vpop.f32.mrf.mxu0
    %192 = vmatprep.mubr.f32.mxu0 0.0
    %193 = vmatmul.mubr.f32.gmra.mxu0 %v80
    %v194 = vpop.f32.mrf.mxu0
    %v195 = vadd.f32 0.0, %v194
    %v196 = vpop.f32.mrf.mxu0
    %197 = vmatprep.mubr.f32.mxu0 0.0
    %198 = vmatmul.mubr.f32.gmra.mxu0 %v81
    %v199 = vpop.f32.mrf.mxu0
    %v200 = vadd.f32 0.0, %v199
    %v201 = vpop.f32.mrf.mxu0
    %202 = vmatprep.mubr.f32.mxu0 0.0
    %203 = vmatmul.mubr.f32.gmra.mxu0 %v82
    %v204 = vpop.f32.mrf.mxu0
    %v205 = vadd.f32 0.0, %v204
    %v206 = vpop.f32.mrf.mxu0
    %207 = vmatprep.mubr.f32.mxu0 0.0
    %208 = vmatmul.mubr.f32.gmra.mxu0 %v83
    %v209 = vpop.f32.mrf.mxu0
    %v210 = vadd.f32 0.0, %v209
    %v211 = vpop.f32.mrf.mxu0
    %212 = vmatprep.mubr.f32.mxu0 0.0
    %213 = vmatmul.mubr.f32.gmra.mxu0 %v84
    %v214 = vpop.f32.mrf.mxu0
    %v215 = vadd.f32 0.0, %v214
    %v216 = vpop.f32.mrf.mxu0
    %217 = vmatprep.mubr.f32.mxu0 0.0
    %218 = vmatmul.mubr.f32.gmra.mxu0 %v85
    %v219 = vpop.f32.mrf.mxu0
    %v220 = vadd.f32 0.0, %v219
    %v221 = vpop.f32.mrf.mxu0
    %222 = vmatprep.mubr.f32.mxu0 0.0
    %223 = vmatmul.mubr.f32.gmra.mxu0 %v86
    %v224 = vpop.f32.mrf.mxu0
    %v225 = vadd.f32 0.0, %v224
    %v226 = vpop.f32.mrf.mxu0
    %227 = vmatprep.mubr.f32.mxu0 0.0
    %228 = vmatmul.mubr.f32.gmra.mxu0 %v87
    %v229 = vpop.f32.mrf.mxu0
    %v230 = vadd.f32 0.0, %v229
    %v231 = vpop.f32.mrf.mxu0
    %232 = vmatprep.mubr.f32.mxu0 0.0
    %233 = vmatmul.mubr.f32.gmra.mxu0 %v88
    %v234 = vpop.f32.mrf.mxu0
    %v235 = vadd.f32 0.0, %v234
    %v236 = vpop.f32.mrf.mxu0
    %237 = vmatprep.mubr.f32.mxu0 0.0
    %238 = vmatmul.mubr.f32.gmra.mxu0 %v89
    %v239 = vpop.f32.mrf.mxu0
    %v240 = vadd.f32 0.0, %v239
    %v241 = vpop.f32.mrf.mxu0
    %242 = vmatprep.mubr.f32.mxu0 0.0
    %243 = vmatmul.mubr.f32.gmra.mxu0 %v90
    %v244 = vpop.f32.mrf.mxu0
    %v245 = vadd.f32 0.0, %v244
    %v246 = vpop.f32.mrf.mxu0
    %247 = vmatprep.mubr.f32.mxu0 0.0
    %248 = vmatmul.mubr.f32.gmra.mxu0 %v91
    %v249 = vpop.f32.mrf.mxu0
    %v250 = vadd.f32 0.0, %v249
    %v251 = vpop.f32.mrf.mxu0
    %252 = vdwg.mxu0
    %v253 = vadd.f32 %v60, %v175
    %v254 = vadd.f32 %v61, %v180
    %v255 = vadd.f32 %v62, %v185
    %v256 = vadd.f32 %v63, %v190
    %v257 = vadd.f32 %v64, %v195
    %v258 = vadd.f32 %v65, %v200
    %v259 = vadd.f32 %v66, %v205
    %v260 = vadd.f32 %v67, %v210
    %v261 = vadd.f32 %v68, %v215
    %v262 = vadd.f32 %v69, %v220
    %v263 = vadd.f32 %v70, %v225
    %v264 = vadd.f32 %v71, %v230
    %v265 = vadd.f32 %v72, %v235
    %v266 = vadd.f32 %v73, %v240
    %v267 = vadd.f32 %v74, %v245
    %v268 = vadd.f32 %v75, %v250
    %269 = vst [vmem:[#allocation2] sm:$0xff] %v253
    %270 = vst [vmem:[#allocation2 + $0x8] sm:$0xff] %v254
    %271 = vst [vmem:[#allocation2 + $0x10] sm:$0xff] %v255
    %272 = vst [vmem:[#allocation2 + $0x18] sm:$0xff] %v256
    %273 = vst [vmem:[#allocation2 + $0x20] sm:$0xff] %v257
    %274 = vst [vmem:[#allocation2 + $0x28] sm:$0xff] %v258
    %275 = vst [vmem:[#allocation2 + $0x30] sm:$0xff] %v259
    %276 = vst [vmem:[#allocation2 + $0x38] sm:$0xff] %v260
    %277 = vst [vmem:[#allocation2 + $0x40] sm:$0xff] %v261
    %278 = vst [vmem:[#allocation2 + $0x48] sm:$0xff] %v262
    %279 = vst [vmem:[#allocation2 + $0x50] sm:$0xff] %v263
    %280 = vst [vmem:[#allocation2 + $0x58] sm:$0xff] %v264
    %281 = vst [vmem:[#allocation2 + $0x60] sm:$0xff] %v265
    %282 = vst [vmem:[#allocation2 + $0x68] sm:$0xff] %v266
    %283 = vst [vmem:[#allocation2 + $0x70] sm:$0xff] %v267
    %284 = vst [vmem:[#allocation2 + $0x78] sm:$0xff] %v268
    // Predicated region
    $region22: #{tpu_custom_call.1} parent=1 // pred_check
      %p285 = pneg %p40
    $region23: #{tpu_custom_call.1} parent=1 // pred_check_branch
      %287 = sbr.rel (%p285) target = $region25
    $region24: #{tpu_custom_call.1} parent=1 // pred_region
      %v288 = vld [vmem:[#allocation2] sm:$0xff]
      %v289 = vld [vmem:[#allocation2 + $0x8] sm:$0xff]
      %v290 = vld [vmem:[#allocation2 + $0x10] sm:$0xff]
      %v291 = vld [vmem:[#allocation2 + $0x18] sm:$0xff]
      %v292 = vld [vmem:[#allocation2 + $0x20] sm:$0xff]
      %v293 = vld [vmem:[#allocation2 + $0x28] sm:$0xff]
      %v294 = vld [vmem:[#allocation2 + $0x30] sm:$0xff]
      %v295 = vld [vmem:[#allocation2 + $0x38] sm:$0xff]
      %v296 = vld [vmem:[#allocation2 + $0x40] sm:$0xff]
      %v297 = vld [vmem:[#allocation2 + $0x48] sm:$0xff]
      %v298 = vld [vmem:[#allocation2 + $0x50] sm:$0xff]
      %v299 = vld [vmem:[#allocation2 + $0x58] sm:$0xff]
      %v300 = vld [vmem:[#allocation2 + $0x60] sm:$0xff]
      %v301 = vld [vmem:[#allocation2 + $0x68] sm:$0xff]
      %v302 = vld [vmem:[#allocation2 + $0x70] sm:$0xff]
      %v303 = vld [vmem:[#allocation2 + $0x78] sm:$0xff]
      %304 = vst [vmem:[#allocation8] sm:$0xff] %v288
      %305 = vst [vmem:[#allocation8 + $0x8] sm:$0xff] %v289
      %306 = vst [vmem:[#allocation8 + $0x10] sm:$0xff] %v290
      %307 = vst [vmem:[#allocation8 + $0x18] sm:$0xff] %v291
      %308 = vst [vmem:[#allocation8 + $0x20] sm:$0xff] %v292
      %309 = vst [vmem:[#allocation8 + $0x28] sm:$0xff] %v293
      %310 = vst [vmem:[#allocation8 + $0x30] sm:$0xff] %v294
      %311 = vst [vmem:[#allocation8 + $0x38] sm:$0xff] %v295
      %312 = vst [vmem:[#allocation8 + $0x40] sm:$0xff] %v296
      %313 = vst [vmem:[#allocation8 + $0x48] sm:$0xff] %v297
      %314 = vst [vmem:[#allocation8 + $0x50] sm:$0xff] %v298
      %315 = vst [vmem:[#allocation8 + $0x58] sm:$0xff] %v299
      %316 = vst [vmem:[#allocation8 + $0x60] sm:$0xff] %v300
      %317 = vst [vmem:[#allocation8 + $0x68] sm:$0xff] %v301
      %318 = vst [vmem:[#allocation8 + $0x70] sm:$0xff] %v302
      %319 = vst [vmem:[#allocation8 + $0x78] sm:$0xff] %v303
    $region25: #{tpu_custom_call.1} parent=1 // pred_fallthru
      _
    // Predicated region
    $region26: #{tpu_custom_call.1} parent=1 // pred_check
      _
    $region27: #{tpu_custom_call.1} parent=1 // pred_check_branch
      %321 = sbr.rel (0) target = $region29
    $region28: #{tpu_custom_call.1} parent=1 // pred_region
      %s323 = ssub.s32 2048, 2048
      %324 = vsyncadd [#allocation5], %s323
      %s325 = sshll.u32 [#allocation8], 4
      %s326 = int_to_ptr.vmem [resolvable:$true] %s325
      %331 = dma.vmem_to_hbm [thread:$0]  %s326, 2048, %s2, [#allocation5], 128, 128, 8
    $region29: #{tpu_custom_call.1} parent=1 // pred_fallthru
      _
    // Predicated region
    $region30: #{tpu_custom_call.1} parent=1 // pred_check
      _
    $region31: #{tpu_custom_call.1} parent=1 // pred_check_branch
      %333 = sbr.rel (0) target = $region33
    $region32: #{tpu_custom_call.1} parent=1 // pred_region
      %334 = dma.done [#allocation5], 2048
    $region33: #{tpu_custom_call.1} parent=1 // pred_fallthru
      _
    %335 = vsyncpa [#allocation4], 1
    %336 = vsyncpa [#allocation7], 1
    %337 = vsyncpa [#allocation5], 1

</llo_original>
